<compile_context>
chip_gen: v7x
topology: tpu7x:2x2x1
jax: 0.10.0
libtpu: 0.0.40
codegen_flags: <defaults>
</compile_context>

<pallas_src>
import functools

import jax
import jax.numpy as jnp
from jax.experimental import pallas as pl
from jax.experimental.pallas import tpu as pltpu


def _round_up(x, m):
    return (x + m - 1) // m * m


def _make_mlp_kernel(out_size):
    def kernel(x_ref, w1_ref, b1_ref, w2_ref, b2_ref, w3_ref, b3_ref, o_ref):
        # Layer 1: (TM, D_in) @ (D_in, H) + (1, H), ReLU.  f32 accumulate on MXU.
        h1 = jnp.dot(x_ref[...], w1_ref[...], preferred_element_type=jnp.float32)
        h1 = jnp.maximum(h1 + b1_ref[...], 0.0)

        # Layer 2: (TM, H) @ (H, H/2) + (1, H/2), ReLU.
        h2 = jnp.dot(h1.astype(w2_ref.dtype), w2_ref[...],
                     preferred_element_type=jnp.float32)
        h2 = jnp.maximum(h2 + b2_ref[...], 0.0)

        if out_size == 1:
            # N=1 matmul would waste >99% of an MXU pass; do it on VPU + XLU:
            #   h3 = sum(h2 * w3_row, axis=-1) + b3
            h3 = jnp.sum(h2 * w3_ref[...], axis=-1, keepdims=True) + b3_ref[...]
            # Lane-dense store: broadcast into the 128-wide slab so the store
            # is a full (unmasked) vst; the wrapper slices [:, :1].
            o_ref[...] = jnp.broadcast_to(h3, o_ref.shape).astype(o_ref.dtype)
        else:
            # General case: w3/b3 zero-padded to the 128-lane slab, MXU matmul.
            h3 = jnp.dot(h2.astype(w3_ref.dtype), w3_ref[...],
                         preferred_element_type=jnp.float32)
            o_ref[...] = (h3 + b3_ref[...]).astype(o_ref.dtype)

    return kernel


@functools.partial(jax.jit, static_argnames=("compute_dtype", "block_batch"))
def simple_time_series_model(x, params, *, compute_dtype=jnp.float32,
                             block_batch=512):
    """Forward pass of SimpleTimeSeriesModel.

    x: (B, seq_length, num_features, feature_length), contiguous, feature axes
       last (so the flatten below is a free reshape, no HBM copy).
    params: (w1, b1, w2, b2, w3, b3); weights stored as (in_dim, out_dim).
    """
    w1, b1, w2, b2, w3, b3 = params
    B = x.shape[0]
    d_in = w1.shape[0]
    out_size = w3.shape[1]

    x_flat = x.reshape(B, d_in)

    # --- batch tiling: pad rows to the sublane height / batch tile.
    min_rows = 8 if jnp.dtype(compute_dtype).itemsize == 4 else 16
    tm = min(block_batch, _round_up(B, min_rows))
    b_pad = _round_up(B, tm)
    if b_pad != B:
        x_flat = jnp.pad(x_flat, ((0, b_pad - B), (0, 0)))
    n_tiles = b_pad // tm

    # --- dtypes: compute dtype for MXU operands, f32 accumulate, f32 biases.
    x_flat = x_flat.astype(compute_dtype)
    w1c = w1.astype(compute_dtype)
    w2c = w2.astype(compute_dtype)

    # --- lane-dense output slab (last dim a multiple of 128).
    o_lanes = _round_up(out_size, 128)
    if out_size == 1:
        w3k = w3.reshape(1, -1).astype(jnp.float32)      # (1, H/2) row for VPU reduce
        b3k = b3.reshape(1, 1).astype(jnp.float32)       # scalar bias
    else:
        w3k = jnp.pad(w3, ((0, 0), (0, o_lanes - out_size))).astype(compute_dtype)
        b3k = jnp.pad(b3.reshape(1, -1),
                      ((0, 0), (0, o_lanes - out_size))).astype(jnp.float32)

    const = lambda i: (0, 0)  # weights / biases stay VMEM-resident across tiles
    out_padded = pl.pallas_call(
        _make_mlp_kernel(out_size),
        out_shape=jax.ShapeDtypeStruct((b_pad, o_lanes), jnp.float32),
        grid=(n_tiles,),
        in_specs=[
            pl.BlockSpec((tm, d_in), lambda i: (i, 0)),   # x tile (streamed)
            pl.BlockSpec(w1c.shape, const),
            pl.BlockSpec(b1.shape, const),
            pl.BlockSpec(w2c.shape, const),
            pl.BlockSpec(b2.shape, const),
            pl.BlockSpec(w3k.shape, const),
            pl.BlockSpec(b3k.shape, const),
        ],
        out_specs=pl.BlockSpec((tm, o_lanes), lambda i: (i, 0)),
        compiler_params=pltpu.CompilerParams(
            # Independent batch tiles -> shard across both TCs on v7x.
            dimension_semantics=("parallel",),
        ),
    )(x_flat, w1c, b1, w2c, b2, w3k, b3k)

    return out_padded[:B, :out_size]


def init_params(total_input_size, hidden_size, output_size, key):
    """Deterministic init mirroring nn.Linear shapes (weights stored transposed)."""
    ks = jax.random.split(key, 6)

    def linear(kw, kb, fan_in, fan_out):
        bound = 1.0 / jnp.sqrt(fan_in)
        w = jax.random.uniform(kw, (fan_in, fan_out), jnp.float32, -bound, bound)
        b = jax.random.uniform(kb, (1, fan_out), jnp.float32, -bound, bound)
        return w, b

    w1, b1 = linear(ks[0], ks[1], total_input_size, hidden_size)
    w2, b2 = linear(ks[2], ks[3], hidden_size, hidden_size // 2)
    w3, b3 = linear(ks[4], ks[5], hidden_size // 2, output_size)
    return (w1, b1, w2, b2, w3, b3)


if __name__ == "__main__":
    # Small shapes consistent with the module.
    batch = 2
    seq_length = 8
    num_features = 4
    feature_length = 4
    hidden_size = 32
    output_size = 1
    total_input_size = seq_length * num_features * feature_length  # 128

    key = jax.random.PRNGKey(0)
    kx, kp = jax.random.split(key)

    x = jax.random.normal(
        kx, (batch, seq_length, num_features, feature_length), jnp.float32
    )
    params = init_params(total_input_size, hidden_size, output_size, kp)

    # Reference in plain JAX.
    w1, b1, w2, b2, w3, b3 = params
    xf = x.reshape(batch, -1)
    ref = jnp.maximum(xf @ w1 + b1, 0.0)
    ref = jnp.maximum(ref @ w2 + b2, 0.0)
    ref = ref @ w3 + b3

    # f32 path: strict check.
    out = jax.block_until_ready(simple_time_series_model(x, params))
    assert out.shape == (batch, output_size)
    assert jnp.allclose(out, ref, atol=1e-5, rtol=1e-5)

    # bf16 compute path (MXU-native on v6e/v7x), f32 accumulate: loose check.
    out_bf16 = jax.block_until_ready(
        simple_time_series_model(x, params, compute_dtype=jnp.bfloat16)
    )
    assert out_bf16.shape == (batch, output_size)
    assert jnp.allclose(out_bf16, ref, atol=1e-1, rtol=1e-1)

    print("KERNEL_OK")
</pallas_src>

<mosaic_0001>
module attributes {stable_mosaic.version = 11 : i64} {
  func.func @kernel(%arg0: i32, %arg1: memref<8x128xf32, #tpu.memory_space<vmem>>, %arg2: memref<128x32xf32, #tpu.memory_space<vmem>>, %arg3: memref<1x32xf32, #tpu.memory_space<vmem>>, %arg4: memref<32x16xf32, #tpu.memory_space<vmem>>, %arg5: memref<1x16xf32, #tpu.memory_space<vmem>>, %arg6: memref<1x16xf32, #tpu.memory_space<vmem>>, %arg7: memref<1x1xf32, #tpu.memory_space<vmem>>, %arg8: memref<8x128xf32, #tpu.memory_space<vmem>>) attributes {dimension_semantics = [#tpu.dimension_semantics<parallel>], iteration_bounds = array<i64: 1>, scalar_prefetch = 0 : i64, scratch_operands = 0 : i64, tpu.core_type = #tpu.core_type<tc>, window_params = [{transform_indices = @transform_0, window_bounds = array<i64: 8, 128>}, {pipeline_mode = #tpu.pipeline_mode<synchronous>, transform_indices = @transform_1, window_bounds = array<i64: 128, 32>}, {pipeline_mode = #tpu.pipeline_mode<synchronous>, transform_indices = @transform_2, window_bounds = array<i64: 1, 32>}, {pipeline_mode = #tpu.pipeline_mode<synchronous>, transform_indices = @transform_3, window_bounds = array<i64: 32, 16>}, {pipeline_mode = #tpu.pipeline_mode<synchronous>, transform_indices = @transform_4, window_bounds = array<i64: 1, 16>}, {pipeline_mode = #tpu.pipeline_mode<synchronous>, transform_indices = @transform_5, window_bounds = array<i64: 1, 16>}, {pipeline_mode = #tpu.pipeline_mode<synchronous>, transform_indices = @transform_6, window_bounds = array<i64: 1, 1>}, {transform_indices = @transform_7, window_bounds = array<i64: 8, 128>}]} {
    %c0 = arith.constant 0 : index
    %c0_0 = arith.constant 0 : index
    %0 = vector.load %arg1[%c0, %c0_0] : memref<8x128xf32, #tpu.memory_space<vmem>>, vector<8x128xf32>
    %c0_1 = arith.constant 0 : index
    %c0_2 = arith.constant 0 : index
    %1 = vector.load %arg2[%c0_1, %c0_2] : memref<128x32xf32, #tpu.memory_space<vmem>>, vector<128x32xf32>
    %cst = arith.constant dense<0.000000e+00> : vector<8x32xf32>
    %2 = tpu.matmul %0, %1, %cst {dimension_numbers = #tpu.dot_dimension_numbers<[1], [0], [0], [1], [0, 0, 1, 1], [], []>} : vector<8x128xf32>, vector<128x32xf32>, vector<8x32xf32> -> vector<8x32xf32>
    %c0_3 = arith.constant 0 : index
    %c0_4 = arith.constant 0 : index
    %3 = vector.load %arg3[%c0_3, %c0_4] : memref<1x32xf32, #tpu.memory_space<vmem>>, vector<1x32xf32>
    %4 = vector.broadcast %3 : vector<1x32xf32> to vector<8x32xf32>
    %5 = arith.addf %2, %4 : vector<8x32xf32>
    %cst_5 = arith.constant 0.000000e+00 : f32
    %6 = vector.broadcast %cst_5 : f32 to vector<8x32xf32>
    %7 = arith.maximumf %5, %6 : vector<8x32xf32>
    %c0_6 = arith.constant 0 : index
    %c0_7 = arith.constant 0 : index
    %8 = vector.load %arg4[%c0_6, %c0_7] : memref<32x16xf32, #tpu.memory_space<vmem>>, vector<32x16xf32>
    %cst_8 = arith.constant dense<0.000000e+00> : vector<8x16xf32>
    %9 = tpu.matmul %7, %8, %cst_8 {dimension_numbers = #tpu.dot_dimension_numbers<[1], [0], [0], [1], [0, 0, 1, 1], [], []>} : vector<8x32xf32>, vector<32x16xf32>, vector<8x16xf32> -> vector<8x16xf32>
    %c0_9 = arith.constant 0 : index
    %c0_10 = arith.constant 0 : index
    %10 = vector.load %arg5[%c0_9, %c0_10] : memref<1x16xf32, #tpu.memory_space<vmem>>, vector<1x16xf32>
    %11 = vector.broadcast %10 : vector<1x16xf32> to vector<8x16xf32>
    %12 = arith.addf %9, %11 : vector<8x16xf32>
    %cst_11 = arith.constant 0.000000e+00 : f32
    %13 = vector.broadcast %cst_11 : f32 to vector<8x16xf32>
    %14 = arith.maximumf %12, %13 : vector<8x16xf32>
    %c0_12 = arith.constant 0 : index
    %c0_13 = arith.constant 0 : index
    %15 = vector.load %arg6[%c0_12, %c0_13] : memref<1x16xf32, #tpu.memory_space<vmem>>, vector<1x16xf32>
    %16 = vector.broadcast %15 : vector<1x16xf32> to vector<8x16xf32>
    %17 = arith.mulf %14, %16 : vector<8x16xf32>
    %cst_14 = arith.constant dense<0.000000e+00> : vector<8xf32>
    %18 = vector.multi_reduction <add>, %17, %cst_14 [1] : vector<8x16xf32> to vector<8xf32>
    %19 = vector.shape_cast %18 : vector<8xf32> to vector<8x1xf32>
    %c0_15 = arith.constant 0 : index
    %c0_16 = arith.constant 0 : index
    %20 = vector.load %arg7[%c0_15, %c0_16] : memref<1x1xf32, #tpu.memory_space<vmem>>, vector<1x1xf32>
    %21 = vector.broadcast %20 : vector<1x1xf32> to vector<8x1xf32>
    %22 = arith.addf %19, %21 : vector<8x1xf32>
    %23 = vector.shape_cast %22 : vector<8x1xf32> to vector<8x1xf32>
    %24 = vector.broadcast %23 : vector<8x1xf32> to vector<8x128xf32>
    %c0_17 = arith.constant 0 : index
    %c0_18 = arith.constant 0 : index
    %25 = vector.load %arg8[%c0_17, %c0_18] : memref<8x128xf32, #tpu.memory_space<vmem>>, vector<8x128xf32>
    tpu.vector_store %arg8[%c0_17, %c0_18], %24 {strides = array<i32>} : memref<8x128xf32, #tpu.memory_space<vmem>>, vector<8x128xf32>,
    return
  }
  func.func @transform_0(%arg0: i32) -> (i32, i32) {
    %c0_i32 = arith.constant 0 : i32
    %c0_i32_0 = arith.constant 0 : i32
    return %arg0, %c0_i32 : i32, i32
  }
  func.func @transform_1(%arg0: i32) -> (i32, i32) {
    %c0_i32 = arith.constant 0 : i32
    %c0_i32_0 = arith.constant 0 : i32
    %c0_i32_1 = arith.constant 0 : i32
    return %c0_i32, %c0_i32_0 : i32, i32
  }
  func.func @transform_2(%arg0: i32) -> (i32, i32) {
    %c0_i32 = arith.constant 0 : i32
    %c0_i32_0 = arith.constant 0 : i32
    %c0_i32_1 = arith.constant 0 : i32
    return %c0_i32, %c0_i32_0 : i32, i32
  }
  func.func @transform_3(%arg0: i32) -> (i32, i32) {
    %c0_i32 = arith.constant 0 : i32
    %c0_i32_0 = arith.constant 0 : i32
    %c0_i32_1 = arith.constant 0 : i32
    return %c0_i32, %c0_i32_0 : i32, i32
  }
  func.func @transform_4(%arg0: i32) -> (i32, i32) {
    %c0_i32 = arith.constant 0 : i32
    %c0_i32_0 = arith.constant 0 : i32
    %c0_i32_1 = arith.constant 0 : i32
    return %c0_i32, %c0_i32_0 : i32, i32
  }
  func.func @transform_5(%arg0: i32) -> (i32, i32) {
    %c0_i32 = arith.constant 0 : i32
    %c0_i32_0 = arith.constant 0 : i32
    %c0_i32_1 = arith.constant 0 : i32
    return %c0_i32, %c0_i32_0 : i32, i32
  }
  func.func @transform_6(%arg0: i32) -> (i32, i32) {
    %c0_i32 = arith.constant 0 : i32
    %c0_i32_0 = arith.constant 0 : i32
    %c0_i32_1 = arith.constant 0 : i32
    return %c0_i32, %c0_i32_0 : i32, i32
  }
  func.func @transform_7(%arg0: i32) -> (i32, i32) {
    %c0_i32 = arith.constant 0 : i32
    %c0_i32_0 = arith.constant 0 : i32
    return %arg0, %c0_i32 : i32, i32
  }
}

</mosaic_0001>

<llo_original>
// kernel: simple_time_series_model.1
$region0: #{simple_time_series_model.1}
  #allocation0 [shape = 'u32[]', space=smem, size = 0x4, offset = 0x4, fixed_abs, tag = 'smem constant byte address 0x4 - core index']
  #allocation1 [shape = 'u32[144,128]{1,0:T(1,128)}', space=vmem, size = 0x12000, scoped, tag = 'internal scratch']
  #allocation2 [shape = 'f32[1,1]{1,0:T(1,128)S(1)}', space=vmem, size = 0x200, scoped, tag = 'scoped memory for simple_time_series_model.1']
  %s0 = inlined_call_operand.vmem [shape: f32[8,128], index: 0, kind: input, shape index: {}]
  %s1 = inlined_call_operand.vmem [shape: f32[128,32], index: 1, kind: input, shape index: {}]
  %s2 = inlined_call_operand.vmem [shape: f32[1,32], index: 2, kind: input, shape index: {}]
  %s3 = inlined_call_operand.vmem [shape: f32[32,16], index: 3, kind: input, shape index: {}]
  %s4 = inlined_call_operand.vmem [shape: f32[1,16], index: 4, kind: input, shape index: {}]
  %s5 = inlined_call_operand.vmem [shape: f32[1,16], index: 5, kind: input, shape index: {}]
  %s6 = inlined_call_operand.<no memory space> [shape: f32[1,1], index: 6, kind: input, shape index: {}]
  %s7 = inlined_call_operand.vmem [shape: f32[8,128], index: 7, kind: output, shape index: {}]
  %s8 = sld [smem:[#allocation0]]
  $region38: #{simple_time_series_model.1} parent=0
    _
  %s10 = ssub.s32 1, %s8
  %s11 = scalar_select 0, %s10, %s8
  %v12 = vstv %s6
  %13 = vst [vmem:[#allocation2] sm:$0x1] %v12
  // Predicated region
  $region2: #{simple_time_series_model.1} parent=0 // pred_check
    _
  $region3: #{simple_time_series_model.1} parent=0 // pred_check_branch
    %15 = sbr.rel (0) target = $region5
  $region4: #{simple_time_series_model.1} parent=0 // pred_region
    _
  $region5: #{simple_time_series_model.1} parent=0 // pred_fallthru
    _
  // Predicated region
  $region6: #{simple_time_series_model.1} parent=0 // pred_check
    _
  $region7: #{simple_time_series_model.1} parent=0 // pred_check_branch
    %17 = sbr.rel (0) target = $region9
  $region8: #{simple_time_series_model.1} parent=0 // pred_region
    _
  $region9: #{simple_time_series_model.1} parent=0 // pred_fallthru
    _
  // Predicated region
  $region10: #{simple_time_series_model.1} parent=0 // pred_check
    _
  $region11: #{simple_time_series_model.1} parent=0 // pred_check_branch
    %19 = sbr.rel (0) target = $region13
  $region12: #{simple_time_series_model.1} parent=0 // pred_region
    _
  $region13: #{simple_time_series_model.1} parent=0 // pred_fallthru
    _
  // Predicated region
  $region14: #{simple_time_series_model.1} parent=0 // pred_check
    _
  $region15: #{simple_time_series_model.1} parent=0 // pred_check_branch
    %21 = sbr.rel (0) target = $region17
  $region16: #{simple_time_series_model.1} parent=0 // pred_region
    _
  $region17: #{simple_time_series_model.1} parent=0 // pred_fallthru
    _
  // Predicated region
  $region18: #{simple_time_series_model.1} parent=0 // pred_check
    _
  $region19: #{simple_time_series_model.1} parent=0 // pred_check_branch
    %23 = sbr.rel (0) target = $region21
  $region20: #{simple_time_series_model.1} parent=0 // pred_region
    _
  $region21: #{simple_time_series_model.1} parent=0 // pred_fallthru
    _
  // Predicated region
  $region22: #{simple_time_series_model.1} parent=0 // pred_check
    _
  $region23: #{simple_time_series_model.1} parent=0 // pred_check_branch
    %25 = sbr.rel (0) target = $region25
  $region24: #{simple_time_series_model.1} parent=0 // pred_region
    _
  $region25: #{simple_time_series_model.1} parent=0 // pred_fallthru
    _
  // Predicated region
  $region26: #{simple_time_series_model.1} parent=0 // pred_check
    _
  $region27: #{simple_time_series_model.1} parent=0 // pred_check_branch
    %27 = sbr.rel (0) target = $region29
  $region28: #{simple_time_series_model.1} parent=0 // pred_region
    _
  $region29: #{simple_time_series_model.1} parent=0 // pred_fallthru
    _
  %v28 = vld [vmem:[%s0] sm:$0xff]
  %v29 = vld [vmem:[%s1] sm:$0xff]
  %v30 = vld [vmem:[%s1 + $0x8] sm:$0xff]
  %v31 = vld [vmem:[%s1 + $0x10] sm:$0xff]
  %v32 = vld [vmem:[%s1 + $0x18] sm:$0xff]
  %v33 = vld [vmem:[%s1 + $0x20] sm:$0xff]
  %v34 = vld [vmem:[%s1 + $0x28] sm:$0xff]
  %v35 = vld [vmem:[%s1 + $0x30] sm:$0xff]
  %v36 = vld [vmem:[%s1 + $0x38] sm:$0xff]
  %v37 = vld [vmem:[%s1 + $0x40] sm:$0xff]
  %v38 = vld [vmem:[%s1 + $0x48] sm:$0xff]
  %v39 = vld [vmem:[%s1 + $0x50] sm:$0xff]
  %v40 = vld [vmem:[%s1 + $0x58] sm:$0xff]
  %v41 = vld [vmem:[%s1 + $0x60] sm:$0xff]
  %v42 = vld [vmem:[%s1 + $0x68] sm:$0xff]
  %v43 = vld [vmem:[%s1 + $0x70] sm:$0xff]
  %v44 = vld [vmem:[%s1 + $0x78] sm:$0xff]
  %v45 = vld [vmem:[%s2] sm:$0x1]
  %v47 = vlaneseq
  %v48 = vshrl.u32 %v47, 7
  %v49 = vsub.s32 0, %v48
  %v50 = vrot.slane %v45, %v49
  %52 = vmatprep.subr.mxu0 0.0
  %53 = vmatpush1.msra.mxu0 %v29
  %54 = vmatprep.subr.mxu0 0.0
  %55 = vmatpush1.msra.mxu0 %v30
  %56 = vmatprep.subr.mxu0 0.0
  %57 = vmatpush1.msra.mxu0 %v31
  %58 = vmatprep.subr.mxu0 0.0
  %59 = vmatpush1.msra.mxu0 %v32
  %60 = vmatprep.subr.mxu0 0.0
  %61 = vmatpush1.msra.mxu0 %v33
  %62 = vmatprep.subr.mxu0 0.0
  %63 = vmatpush1.msra.mxu0 %v34
  %64 = vmatprep.subr.mxu0 0.0
  %65 = vmatpush1.msra.mxu0 %v35
  %66 = vmatprep.subr.mxu0 0.0
  %67 = vmatpush1.msra.mxu0 %v36
  %68 = vmatprep.subr.mxu0 0.0
  %69 = vmatpush1.msra.mxu0 %v37
  %70 = vmatprep.subr.mxu0 0.0
  %71 = vmatpush1.msra.mxu0 %v38
  %72 = vmatprep.subr.mxu0 0.0
  %73 = vmatpush1.msra.mxu0 %v39
  %74 = vmatprep.subr.mxu0 0.0
  %75 = vmatpush1.msra.mxu0 %v40
  %76 = vmatprep.subr.mxu0 0.0
  %77 = vmatpush1.msra.mxu0 %v41
  %78 = vmatprep.subr.mxu0 0.0
  %79 = vmatpush1.msra.mxu0 %v42
  %80 = vmatprep.subr.mxu0 0.0
  %81 = vmatpush1.msra.mxu0 %v43
  %82 = vmatprep.subr.mxu0 0.0
  %83 = vmatpush1.msra.mxu0 %v44
  %84 = vmatprep.subr.mxu0 0.0
  %85 = vmatpush1.msra.mxu0 0.0
  %86 = vmatprep.subr.mxu0 0.0
  %87 = vmatpush1.msra.mxu0 0.0
  %88 = vmatprep.subr.mxu0 0.0
  %89 = vmatpush1.msra.mxu0 0.0
  %90 = vmatprep.subr.mxu0 0.0
  %91 = vmatpush1.msra.mxu0 0.0
  %92 = vmatprep.subr.mxu0 0.0
  %93 = vmatpush1.msra.mxu0 0.0
  %94 = vmatprep.subr.mxu0 0.0
  %95 = vmatpush1.msra.mxu0 0.0
  %96 = vmatprep.subr.mxu0 0.0
  %97 = vmatpush1.msra.mxu0 0.0
  %98 = vmatprep.subr.mxu0 0.0
  %99 = vmatpush1.msra.mxu0 0.0
  %100 = vmatprep.subr.mxu0 0.0
  %101 = vmatpush1.msra.mxu0 0.0
  %102 = vmatprep.subr.mxu0 0.0
  %103 = vmatpush1.msra.mxu0 0.0
  %104 = vmatprep.subr.mxu0 0.0
  %105 = vmatpush1.msra.mxu0 0.0
  %106 = vmatprep.subr.mxu0 0.0
  %107 = vmatpush1.msra.mxu0 0.0
  %108 = vmatprep.subr.mxu0 0.0
  %109 = vmatpush1.msra.mxu0 0.0
  %110 = vmatprep.subr.mxu0 0.0
  %111 = vmatpush1.msra.mxu0 0.0
  %112 = vmatprep.subr.mxu0 0.0
  %113 = vmatpush1.msra.mxu0 0.0
  %114 = vmatprep.subr.mxu0 0.0
  %115 = vmatpush1.msra.mxu0 0.0
  %116 = vmatprep.mubr.f32.mxu0 0.0
  %117 = vmatmul.mubr.f32.gmra.mrb[0].mxu0 %v28
  %v118 = vpop.f32.mrb[0].mxu0
  %v119 = vadd.f32 %v50, %v118
  %v120 = vpop.f32.mrb[0].mxu0
  %121 = vdwg.mxu0
  %v122 = vmax.f32 %v119, 0.0
  %v123 = vld [vmem:[%s3] sm:$0xff]
  %v124 = vld [vmem:[%s3 + $0x8] sm:$0xff]
  %v125 = vld [vmem:[%s3 + $0x10] sm:$0xff]
  %v126 = vld [vmem:[%s3 + $0x18] sm:$0xff]
  %v127 = vld [vmem:[%s4] sm:$0x1]
  %v129 = vlaneseq
  %v130 = vshrl.u32 %v129, 7
  %v131 = vsub.s32 0, %v130
  %v132 = vrot.slane %v127, %v131
  %vm134 = vcmask 261120
  %v136 = vsel %vm134, %v122, 0
  %138 = vmatprep.subr.mxu0 0.0
  %139 = vmatpush1.msra.mxu0 %v123
  %140 = vmatprep.subr.mxu0 0.0
  %141 = vmatpush1.msra.mxu0 %v124
  %142 = vmatprep.subr.mxu0 0.0
  %143 = vmatpush1.msra.mxu0 %v125
  %144 = vmatprep.subr.mxu0 0.0
  %145 = vmatpush1.msra.mxu0 %v126
  %146 = vmatprep.subr.mxu0 0.0
  %147 = vmatpush1.msra.mxu0 0.0
  %148 = vmatprep.subr.mxu0 0.0
  %149 = vmatpush1.msra.mxu0 0.0
  %150 = vmatprep.subr.mxu0 0.0
  %151 = vmatpush1.msra.mxu0 0.0
  %152 = vmatprep.subr.mxu0 0.0
  %153 = vmatpush1.msra.mxu0 0.0
  %154 = vmatprep.subr.mxu0 0.0
  %155 = vmatpush1.msra.mxu0 0.0
  %156 = vmatprep.subr.mxu0 0.0
  %157 = vmatpush1.msra.mxu0 0.0
  %158 = vmatprep.subr.mxu0 0.0
  %159 = vmatpush1.msra.mxu0 0.0
  %160 = vmatprep.subr.mxu0 0.0
  %161 = vmatpush1.msra.mxu0 0.0
  %162 = vmatprep.subr.mxu0 0.0
  %163 = vmatpush1.msra.mxu0 0.0
  %164 = vmatprep.subr.mxu0 0.0
  %165 = vmatpush1.msra.mxu0 0.0
  %166 = vmatprep.subr.mxu0 0.0
  %167 = vmatpush1.msra.mxu0 0.0
  %168 = vmatprep.subr.mxu0 0.0
  %169 = vmatpush1.msra.mxu0 0.0
  %170 = vmatprep.subr.mxu0 0.0
  %171 = vmatpush1.msra.mxu0 0.0
  %172 = vmatprep.subr.mxu0 0.0
  %173 = vmatpush1.msra.mxu0 0.0
  %174 = vmatprep.subr.mxu0 0.0
  %175 = vmatpush1.msra.mxu0 0.0
  %176 = vmatprep.subr.mxu0 0.0
  %177 = vmatpush1.msra.mxu0 0.0
  %178 = vmatprep.subr.mxu0 0.0
  %179 = vmatpush1.msra.mxu0 0.0
  %180 = vmatprep.subr.mxu0 0.0
  %181 = vmatpush1.msra.mxu0 0.0
  %182 = vmatprep.subr.mxu0 0.0
  %183 = vmatpush1.msra.mxu0 0.0
  %184 = vmatprep.subr.mxu0 0.0
  %185 = vmatpush1.msra.mxu0 0.0
  %186 = vmatprep.subr.mxu0 0.0
  %187 = vmatpush1.msra.mxu0 0.0
  %188 = vmatprep.subr.mxu0 0.0
  %189 = vmatpush1.msra.mxu0 0.0
  %190 = vmatprep.subr.mxu0 0.0
  %191 = vmatpush1.msra.mxu0 0.0
  %192 = vmatprep.subr.mxu0 0.0
  %193 = vmatpush1.msra.mxu0 0.0
  %194 = vmatprep.subr.mxu0 0.0
  %195 = vmatpush1.msra.mxu0 0.0
  %196 = vmatprep.subr.mxu0 0.0
  %197 = vmatpush1.msra.mxu0 0.0
  %198 = vmatprep.subr.mxu0 0.0
  %199 = vmatpush1.msra.mxu0 0.0
  %200 = vmatprep.subr.mxu0 0.0
  %201 = vmatpush1.msra.mxu0 0.0
  %202 = vmatprep.mubr.f32.mxu0 0.0
  %203 = vmatmul.mubr.f32.gmra.mrb[0].mxu0 %v136
  %v204 = vpop.f32.mrb[0].mxu0
  %v205 = vadd.f32 %v132, %v204
  %v206 = vpop.f32.mrb[0].mxu0
  %207 = vdwg.mxu0
  %v208 = vmax.f32 %v205, 0.0
  %v209 = vld [vmem:[%s5] sm:$0x1]
  %v211 = vlaneseq
  %v212 = vshrl.u32 %v211, 7
  %v213 = vsub.s32 0, %v212
  %v214 = vrot.slane %v209, %v213
  %v216 = vmul.f32 %v208, %v214
  %vm217 = vcmask 130048
  %v218 = vsel %vm217, %v216, 0.0
  %219 = vadd.xlane.f32.xlu0 %v218
  %v220 = vpop.xlane.xlu0 %219
  %v221 = vld [vmem:[#allocation2] sm:$0x1]
  %v223 = vlaneseq
  %v224 = vshrl.u32 %v223, 7
  %v225 = vsub.s32 0, %v224
  %v226 = vrot.slane %v221, %v225
  %v228 = vadd.f32 %v220, %v226
  %230 = vset.pattern.permute.xlu0 0
  %231 = vperm.xlu0 %230, %v228
  %v232 = vpop.permute.xlu0 %231
  %234 = vst [vmem:[%s7] sm:$0xff] %v232
  // Predicated region
  $region30: #{simple_time_series_model.1} parent=0 // pred_check
    _
  $region31: #{simple_time_series_model.1} parent=0 // pred_check_branch
    %236 = sbr.rel (0) target = $region33
  $region32: #{simple_time_series_model.1} parent=0 // pred_region
    _
  $region33: #{simple_time_series_model.1} parent=0 // pred_fallthru
    _
  // Predicated region
  $region34: #{simple_time_series_model.1} parent=0 // pred_check
    _
  $region35: #{simple_time_series_model.1} parent=0 // pred_check_branch
    %238 = sbr.rel (0) target = $region37
  $region36: #{simple_time_series_model.1} parent=0 // pred_region
    _
  $region37: #{simple_time_series_model.1} parent=0 // pred_fallthru
    _

</llo_original>
